<compile_context>
chip_gen: v6e
topology: v6e:2x2x1
jax: 0.10.0
libtpu: 0.0.40
codegen_flags: <defaults>
</compile_context>

<pallas_src>
import math
import functools

import jax
import jax.numpy as jnp
from jax.experimental import pallas as pl
from jax.experimental.pallas import tpu as pltpu


# ----------------------------------------------------------------------------
# Buffer setup (plain JAX, one-time) — identical math to the PyTorch module.
# ----------------------------------------------------------------------------
def make_pos_embedding(emb_size: int, maxlen: int = 5000,
                       dtype=jnp.float32) -> jnp.ndarray:
    den = jnp.exp(
        -jnp.arange(0, emb_size, 2, dtype=jnp.float32) * math.log(10000.0) / emb_size
    )
    pos = jnp.arange(0, maxlen, dtype=jnp.float32).reshape(maxlen, 1)
    pe = jnp.zeros((maxlen, emb_size), dtype=jnp.float32)
    pe = pe.at[:, 0::2].set(jnp.sin(pos * den))
    pe = pe.at[:, 1::2].set(jnp.cos(pos * den))
    return pe[:, None, :].astype(dtype)  # (maxlen, 1, emb_size)


# ----------------------------------------------------------------------------
# Pallas kernels: out = dropout(x + pos_embedding[rows])
# ----------------------------------------------------------------------------
def _pos_enc_eval_kernel(x_ref, pe_ref, o_ref):
    # x_ref: (TS, B, E); pe_ref: (TS, 1, E) -> sublane broadcast over batch.
    o_ref[...] = (x_ref[...] + pe_ref[...]).astype(o_ref.dtype)


def _pos_enc_train_kernel(x_ref, pe_ref, bits_ref, o_ref, *,
                          drop_threshold: int, scale: float):
    y = x_ref[...] + pe_ref[...]
    # Inverted dropout with an integer threshold: r uniform in [0, 2^31),
    # keep iff r >= p * 2^31  (probability 1 - p).
    r = bits_ref[...] & jnp.int32(0x7FFFFFFF)
    keep = r >= jnp.int32(drop_threshold)
    y = jnp.where(keep, y * jnp.asarray(scale, y.dtype), jnp.zeros((), y.dtype))
    o_ref[...] = y.astype(o_ref.dtype)


# ----------------------------------------------------------------------------
# Wrapper
# ----------------------------------------------------------------------------
def _pick_tile(seq_len: int, bytes_per_row: int,
               budget_bytes: int = 12 * 1024 * 1024) -> int:
    # Double-buffered pipeline => ~2 copies of every block resident at once.
    ts = max(1, budget_bytes // (2 * bytes_per_row))
    ts = min(ts, seq_len, 2048)
    if ts >= 8:
        ts = (ts // 8) * 8
    return ts


def positional_encoding(
    x: jnp.ndarray,
    pos_embedding: jnp.ndarray,
    *,
    p: float,
    training: bool = False,
    rng=None,
) -> jnp.ndarray:
    """x: (seq_len, batch, emb_size); pos_embedding: (maxlen, 1, emb_size)."""
    seq_len, batch, emb = x.shape
    maxlen = pos_embedding.shape[0]
    assert seq_len <= maxlen, "seq_len exceeds positional table"

    # Keep the add in x.dtype (no fp32 promotion of the whole tile).
    if pos_embedding.dtype != x.dtype:
        pos_embedding = pos_embedding.astype(x.dtype)

    itemsize = jnp.dtype(x.dtype).itemsize
    use_dropout = bool(training) and float(p) > 0.0

    bytes_per_row = (batch * emb * (2 * itemsize + (4 if use_dropout else 0))
                     + emb * itemsize)
    ts = _pick_tile(seq_len, bytes_per_row)
    grid = (pl.cdiv(seq_len, ts),)

    x_spec = pl.BlockSpec((ts, batch, emb), lambda i: (i, 0, 0))
    pe_spec = pl.BlockSpec((ts, 1, emb), lambda i: (i, 0, 0))
    out_spec = pl.BlockSpec((ts, batch, emb), lambda i: (i, 0, 0))

    n_elems = seq_len * batch * emb
    flops = n_elems  # the broadcast add
    bytes_accessed = 2 * n_elems * itemsize + seq_len * emb * itemsize

    operands = [x, pos_embedding]
    in_specs = [x_spec, pe_spec]

    if use_dropout:
        if rng is None:
            rng = jax.random.PRNGKey(0)
        bits = jax.lax.bitcast_convert_type(
            jax.random.bits(rng, x.shape, dtype=jnp.uint32), jnp.int32)
        operands.append(bits)
        in_specs.append(pl.BlockSpec((ts, batch, emb), lambda i: (i, 0, 0)))
        bytes_accessed += n_elems * 4
        flops += 3 * n_elems  # mask-and, compare, select/scale
        drop_threshold = min(int(round(float(p) * float(1 << 31))), (1 << 31) - 1)
        scale = 1.0 / (1.0 - float(p))
        kernel = functools.partial(
            _pos_enc_train_kernel, drop_threshold=drop_threshold, scale=scale)
    else:
        kernel = _pos_enc_eval_kernel

    return pl.pallas_call(
        kernel,
        out_shape=jax.ShapeDtypeStruct((seq_len, batch, emb), x.dtype),
        grid=grid,
        in_specs=in_specs,
        out_specs=out_spec,
        compiler_params=pltpu.CompilerParams(
            dimension_semantics=("parallel",),
            vmem_limit_bytes=32 * 1024 * 1024,
        ),
        cost_estimate=pl.CostEstimate(
            flops=flops, transcendentals=0, bytes_accessed=bytes_accessed),
    )(*operands)


# ----------------------------------------------------------------------------
# Demo / self-check
# ----------------------------------------------------------------------------
if __name__ == "__main__":
    emb_size = 32
    seq_len = 8
    batch = 2
    maxlen = 5000
    dropout_p = 0.1

    key = jax.random.PRNGKey(0)
    kx, kd = jax.random.split(key)
    x = jax.random.normal(kx, (seq_len, batch, emb_size), dtype=jnp.float32)
    pos_embedding = make_pos_embedding(emb_size, maxlen, dtype=x.dtype)

    ref = x + pos_embedding[:seq_len]

    # Eval mode (dropout = identity): exact match against pure JAX.
    out_eval = positional_encoding(x, pos_embedding, p=dropout_p, training=False)
    out_eval = jax.block_until_ready(out_eval)
    assert out_eval.shape == (seq_len, batch, emb_size)
    assert jnp.allclose(out_eval, ref, atol=1e-6, rtol=1e-6)

    # Training mode: inverted dropout (mask + 1/(1-p) scale) inside the kernel.
    out_train = positional_encoding(
        x, pos_embedding, p=dropout_p, training=True, rng=kd)
    out_train = jax.block_until_ready(out_train)
    assert out_train.shape == (seq_len, batch, emb_size)
    scale = 1.0 / (1.0 - dropout_p)
    kept = out_train != 0
    # Every kept element must equal ref * scale; dropped elements are 0.
    assert jnp.allclose(jnp.where(kept, out_train, ref * scale), ref * scale,
                        atol=1e-5, rtol=1e-5)
    drop_frac = 1.0 - float(jnp.mean(kept.astype(jnp.float32)))
    assert 0.0 <= drop_frac <= 0.35  # loose sanity bound around p=0.1

    print("KERNEL_OK")
</pallas_src>

<mosaic_0001>
module attributes {stable_mosaic.version = 11 : i64} {
  func.func @_pos_enc_eval_kernel(%arg0: i32, %arg1: memref<8x2x32xf32, #tpu.memory_space<vmem>>, %arg2: memref<8x1x32xf32, #tpu.memory_space<vmem>>, %arg3: memref<8x2x32xf32, #tpu.memory_space<vmem>>) attributes {dimension_semantics = [#tpu.dimension_semantics<parallel>], iteration_bounds = array<i64: 1>, scalar_prefetch = 0 : i64, scratch_operands = 0 : i64, tpu.core_type = #tpu.core_type<tc>, window_params = [{transform_indices = @transform_0, window_bounds = array<i64: 8, 2, 32>}, {transform_indices = @transform_1, window_bounds = array<i64: 8, 1, 32>}, {transform_indices = @transform_2, window_bounds = array<i64: 8, 2, 32>}]} {
    %c0 = arith.constant 0 : index
    %c0_0 = arith.constant 0 : index
    %c0_1 = arith.constant 0 : index
    %0 = vector.load %arg1[%c0, %c0_0, %c0_1] : memref<8x2x32xf32, #tpu.memory_space<vmem>>, vector<8x2x32xf32>
    %c0_2 = arith.constant 0 : index
    %c0_3 = arith.constant 0 : index
    %c0_4 = arith.constant 0 : index
    %1 = vector.load %arg2[%c0_2, %c0_3, %c0_4] : memref<8x1x32xf32, #tpu.memory_space<vmem>>, vector<8x1x32xf32>
    %2 = vector.broadcast %1 : vector<8x1x32xf32> to vector<8x2x32xf32>
    %3 = arith.addf %0, %2 : vector<8x2x32xf32>
    %c0_5 = arith.constant 0 : index
    %c0_6 = arith.constant 0 : index
    %c0_7 = arith.constant 0 : index
    %4 = vector.load %arg3[%c0_5, %c0_6, %c0_7] : memref<8x2x32xf32, #tpu.memory_space<vmem>>, vector<8x2x32xf32>
    tpu.vector_store %arg3[%c0_5, %c0_6, %c0_7], %3 {strides = array<i32>} : memref<8x2x32xf32, #tpu.memory_space<vmem>>, vector<8x2x32xf32>,
    return
  }
  func.func @transform_0(%arg0: i32) -> (i32, i32, i32) {
    %c0_i32 = arith.constant 0 : i32
    %c0_i32_0 = arith.constant 0 : i32
    %c0_i32_1 = arith.constant 0 : i32
    return %arg0, %c0_i32, %c0_i32_0 : i32, i32, i32
  }
  func.func @transform_1(%arg0: i32) -> (i32, i32, i32) {
    %c0_i32 = arith.constant 0 : i32
    %c0_i32_0 = arith.constant 0 : i32
    %c0_i32_1 = arith.constant 0 : i32
    return %arg0, %c0_i32, %c0_i32_0 : i32, i32, i32
  }
  func.func @transform_2(%arg0: i32) -> (i32, i32, i32) {
    %c0_i32 = arith.constant 0 : i32
    %c0_i32_0 = arith.constant 0 : i32
    %c0_i32_1 = arith.constant 0 : i32
    return %arg0, %c0_i32, %c0_i32_0 : i32, i32, i32
  }
}

</mosaic_0001>

<llo_original>
// kernel: tpu_custom_call.1
$region0: #{tpu_custom_call.1}
  #allocation0 [shape = 'u32[]', space=smem, size = 0x4, offset = 0x4, fixed_abs, tag = 'smem constant byte address 0x4 - core index']
  #allocation1 [shape = 'u32[144,128]{1,0:T(1,128)}', space=vmem, size = 0x12000, scoped, tag = 'internal scratch']
  %s0 = inlined_call_operand.vmem [shape: f32[8,2,32], index: 0, kind: input, shape index: {}]
  %s1 = inlined_call_operand.vmem [shape: f32[5000,1,32], index: 1, kind: input, shape index: {}]
  %s2 = inlined_call_operand.hbm [shape: f32[8,2,32], index: 2, kind: output, shape index: {}]
  %s3 = sld [smem:[#allocation0]]
  $region18: #{tpu_custom_call.1} parent=0
    _
  %s5 = ssub.s32 1, %s3
  %s6 = scalar_select 0, %s5, %s3
  $region1: #{tpu_custom_call.1} parent=0
    #allocation2 [shape = 'u8[8192]{0}', space=vmem, size = 0x2000, scoped, tag = 'output window, operand 0, single buffered']
    #allocation3 [shape = 's32[1]{0}', space=sflag, size = 0x4, scoped, tag = 'scoped memory for tpu_custom_call.1']
    %7 = vsyncpa [#allocation3], 0
    // Predicated region
    $region2: #{tpu_custom_call.1} parent=1 // pred_check
      _
    $region3: #{tpu_custom_call.1} parent=1 // pred_check_branch
      %9 = sbr.rel (0) target = $region5
    $region4: #{tpu_custom_call.1} parent=1 // pred_region
      _
    $region5: #{tpu_custom_call.1} parent=1 // pred_fallthru
      _
    // Predicated region
    $region6: #{tpu_custom_call.1} parent=1 // pred_check
      _
    $region7: #{tpu_custom_call.1} parent=1 // pred_check_branch
      %11 = sbr.rel (0) target = $region9
    $region8: #{tpu_custom_call.1} parent=1 // pred_region
      _
    $region9: #{tpu_custom_call.1} parent=1 // pred_fallthru
      _
    %v12 = vld [vmem:[%s0] sm:$0x3]
    %v13 = vld [vmem:[%s0 + $0x2] sm:$0x3]
    %v14 = vld [vmem:[%s0 + $0x4] sm:$0x3]
    %v15 = vld [vmem:[%s0 + $0x6] sm:$0x3]
    %v16 = vld [vmem:[%s0 + $0x8] sm:$0x3]
    %v17 = vld [vmem:[%s0 + $0xa] sm:$0x3]
    %v18 = vld [vmem:[%s0 + $0xc] sm:$0x3]
    %v19 = vld [vmem:[%s0 + $0xe] sm:$0x3]
    %v20 = vld [vmem:[%s1] sm:$0x1]
    %v21 = vld [vmem:[%s1 + $0x1] sm:$0x1]
    %v22 = vld [vmem:[%s1 + $0x2] sm:$0x1]
    %v23 = vld [vmem:[%s1 + $0x3] sm:$0x1]
    %v24 = vld [vmem:[%s1 + $0x4] sm:$0x1]
    %v25 = vld [vmem:[%s1 + $0x5] sm:$0x1]
    %v26 = vld [vmem:[%s1 + $0x6] sm:$0x1]
    %v27 = vld [vmem:[%s1 + $0x7] sm:$0x1]
    %v36 = vlaneseq
    %v37 = vshrl.u32 %v36, 7
    %v38 = vsub.s32 0, %v37
    %v39 = vrot.slane %v20, %v38
    %v40 = vlaneseq
    %v41 = vshrl.u32 %v40, 7
    %v42 = vsub.s32 0, %v41
    %v43 = vrot.slane %v21, %v42
    %v44 = vlaneseq
    %v45 = vshrl.u32 %v44, 7
    %v46 = vsub.s32 0, %v45
    %v47 = vrot.slane %v22, %v46
    %v48 = vlaneseq
    %v49 = vshrl.u32 %v48, 7
    %v50 = vsub.s32 0, %v49
    %v51 = vrot.slane %v23, %v50
    %v52 = vlaneseq
    %v53 = vshrl.u32 %v52, 7
    %v54 = vsub.s32 0, %v53
    %v55 = vrot.slane %v24, %v54
    %v56 = vlaneseq
    %v57 = vshrl.u32 %v56, 7
    %v58 = vsub.s32 0, %v57
    %v59 = vrot.slane %v25, %v58
    %v60 = vlaneseq
    %v61 = vshrl.u32 %v60, 7
    %v62 = vsub.s32 0, %v61
    %v63 = vrot.slane %v26, %v62
    %v64 = vlaneseq
    %v65 = vshrl.u32 %v64, 7
    %v66 = vsub.s32 0, %v65
    %v67 = vrot.slane %v27, %v66
    %v76 = vadd.f32 %v12, %v39
    %v77 = vadd.f32 %v13, %v43
    %v78 = vadd.f32 %v14, %v47
    %v79 = vadd.f32 %v15, %v51
    %v80 = vadd.f32 %v16, %v55
    %v81 = vadd.f32 %v17, %v59
    %v82 = vadd.f32 %v18, %v63
    %v83 = vadd.f32 %v19, %v67
    %vm84 = vcmask 254976
    %85 = vst.msk [vmem:[#allocation2] sm:$0x3] %vm84, %v76
    %86 = vst.msk [vmem:[#allocation2 + $0x2] sm:$0x3] %vm84, %v77
    %87 = vst.msk [vmem:[#allocation2 + $0x4] sm:$0x3] %vm84, %v78
    %88 = vst.msk [vmem:[#allocation2 + $0x6] sm:$0x3] %vm84, %v79
    %89 = vst.msk [vmem:[#allocation2 + $0x8] sm:$0x3] %vm84, %v80
    %90 = vst.msk [vmem:[#allocation2 + $0xa] sm:$0x3] %vm84, %v81
    %91 = vst.msk [vmem:[#allocation2 + $0xc] sm:$0x3] %vm84, %v82
    %92 = vst.msk [vmem:[#allocation2 + $0xe] sm:$0x3] %vm84, %v83
    // Predicated region
    $region10: #{tpu_custom_call.1} parent=1 // pred_check
      _
    $region11: #{tpu_custom_call.1} parent=1 // pred_check_branch
      %94 = sbr.rel (0) target = $region13
    $region12: #{tpu_custom_call.1} parent=1 // pred_region
      %s96 = ssub.s32 256, 256
      %97 = vsyncadd [#allocation3], %s96
      %s98 = sshll.u32 [#allocation2], 4
      %s99 = int_to_ptr.vmem [resolvable:$true] %s98
      %104 = dma.vmem_to_hbm [thread:$0]  %s99, 256, %s2, [#allocation3], 32, 32, 2
    $region13: #{tpu_custom_call.1} parent=1 // pred_fallthru
      _
    // Predicated region
    $region14: #{tpu_custom_call.1} parent=1 // pred_check
      _
    $region15: #{tpu_custom_call.1} parent=1 // pred_check_branch
      %106 = sbr.rel (0) target = $region17
    $region16: #{tpu_custom_call.1} parent=1 // pred_region
      %107 = dma.done [#allocation3], 256
    $region17: #{tpu_custom_call.1} parent=1 // pred_fallthru
      _
    %108 = vsyncpa [#allocation3], 1

</llo_original>
